<compile_context>
chip_gen: v7x
topology: tpu7x:2x2x1
jax: 0.10.0
libtpu: 0.0.40
codegen_flags: <defaults>
</compile_context>

<pallas_src>
import functools
import math

import jax
import jax.numpy as jnp
from jax.experimental import pallas as pl
from jax.experimental.pallas import tpu as pltpu

# ----------------------------- model config (small) -----------------------------
B = 2          # batch
L = 8          # n_steps (seq len)
D_MODEL = 32
N_HEADS = 2
D_K = 16
D_V = 16


# ----------------------------- Pallas kernel ------------------------------------
def _mha_kernel(*refs, n_heads, d_k, d_v, has_mask, emit_attn):
    """Fused multi-head scaled-dot-product attention for the whole batch."""
    it = iter(refs)
    q_ref = next(it)
    k_ref = next(it)
    v_ref = next(it)
    mask_ref = next(it) if has_mask else None
    wqkv_ref = next(it)          # (D, H*dk + H*dk + H*dv); W_q columns pre-scaled by 1/sqrt(dk)
    wfc_ref = next(it)           # (H*dv, D)
    out_ref = next(it)           # (B, Lq, D)
    attn_ref = next(it) if emit_attn else None   # (B, H, Lq, Lk)

    b, lq, d_model = q_ref.shape
    lk = k_ref.shape[1]
    hdk = n_heads * d_k
    hdv = n_heads * d_v

    # Flatten (B, L, D) -> (B*L, D): leading-dim collapse only (minor dims untouched).
    xq = q_ref[...].reshape(b * lq, d_model).astype(jnp.float32)
    xk = k_ref[...].reshape(b * lk, d_model).astype(jnp.float32)
    xv = v_ref[...].reshape(b * lk, d_model).astype(jnp.float32)

    # Fused QKV projection: ONE MXU push for all three projections (latency-bound regime).
    x_all = jnp.concatenate([xq, xk, xv], axis=0)                    # (B*Lq + 2*B*Lk, D)
    w_all = wqkv_ref[...].astype(jnp.float32)                        # (D, 2*H*dk + H*dv)
    proj = jnp.dot(x_all, w_all, preferred_element_type=jnp.float32)

    nq = b * lq
    nk = b * lk
    qp = proj[:nq, 0:hdk].reshape(b, lq, hdk)                        # already 1/sqrt(dk)-scaled
    kp = proj[nq:nq + nk, hdk:2 * hdk].reshape(b, lk, hdk)
    vp = proj[nq + nk:nq + 2 * nk, 2 * hdk:2 * hdk + hdv].reshape(b, lk, hdv)

    # Hoisted out of the unrolled head loop (JAX does not CSE the compare per head).
    mask_keep = (mask_ref[...] > 0) if has_mask else None            # (B, Lq, Lk) bool

    ctx_heads = []
    for h in range(n_heads):  # static unroll; score/context dots batched over B
        qh = qp[:, :, h * d_k:(h + 1) * d_k]          # (B, Lq, dk)
        kh = kp[:, :, h * d_k:(h + 1) * d_k]          # (B, Lk, dk)
        vh = vp[:, :, h * d_v:(h + 1) * d_v]          # (B, Lk, dv)

        scores = jnp.einsum("bqd,bkd->bqk", qh, kh,
                            preferred_element_type=jnp.float32)      # temp already folded in
        if has_mask:
            scores = jnp.where(mask_keep, scores, -1e9)              # 0 in mask => masked out
        m = jnp.max(scores, axis=-1, keepdims=True)
        e = jnp.exp(scores - m)
        attn = e * pl.reciprocal(jnp.sum(e, axis=-1, keepdims=True), approx=True)

        if emit_attn:
            # Directly in the module's (B, H, Lq, Lk) layout -> no wrapper transpose.
            attn_ref[:, h, :, :] = attn.astype(attn_ref.dtype)

        ctx_heads.append(jnp.einsum("bqk,bkd->bqd", attn, vh,
                                    preferred_element_type=jnp.float32))

    # Concat heads -> single full-width output projection.
    ctx = jnp.concatenate(ctx_heads, axis=-1).reshape(b * lq, hdv)
    out = jnp.dot(ctx, wfc_ref[...].astype(jnp.float32), preferred_element_type=jnp.float32)
    out_ref[...] = out.reshape(b, lq, d_model).astype(out_ref.dtype)


# ----------------------------- wrapper -------------------------------------------
def multi_head_attention(q, k, v, wq, wk, wv, wfc, attn_mask=None, *,
                         n_heads, d_k, d_v, return_attn_weights=True):
    """Matches MultiHeadAttention.forward: returns (output, attn_weights).

    When return_attn_weights=False the attention map is neither stored nor DMA'd back.
    """
    b, lq, d_model = q.shape
    lk = k.shape[1]
    has_mask = attn_mask is not None

    # Fold softmax temperature into W_q and fuse [W_q | W_k | W_v] once (weight prep).
    inv_temp = 1.0 / math.sqrt(d_k)
    w_qkv = jnp.concatenate([wq * inv_temp, wk, wv], axis=1)         # (D, 2*H*dk + H*dv)

    kernel = functools.partial(_mha_kernel, n_heads=n_heads, d_k=d_k, d_v=d_v,
                               has_mask=has_mask, emit_attn=return_attn_weights)
    vmem = pl.BlockSpec(memory_space=pltpu.MemorySpace.VMEM)

    args = (q, k, v)
    if has_mask:
        args = args + (attn_mask.astype(jnp.float32),)               # (B, Lq, Lk), 0 = mask out
    args = args + (w_qkv, wfc)

    if return_attn_weights:
        out_shape = (jax.ShapeDtypeStruct((b, lq, d_model), q.dtype),
                     jax.ShapeDtypeStruct((b, n_heads, lq, lk), jnp.float32))
        out_specs = (vmem, vmem)
    else:
        out_shape = jax.ShapeDtypeStruct((b, lq, d_model), q.dtype)
        out_specs = vmem

    result = pl.pallas_call(
        kernel,
        out_shape=out_shape,
        in_specs=[vmem] * len(args),
        out_specs=out_specs,
    )(*args)

    if return_attn_weights:
        out, attn = result
        return out, attn
    return result, None


# ----------------------------- pure-JAX reference ---------------------------------
def _ref_mha(q, k, v, wq, wk, wv, wfc, mask=None):
    b, lq, _ = q.shape
    lk = k.shape[1]
    qh = (q @ wq).reshape(b, lq, N_HEADS, D_K).transpose(0, 2, 1, 3)
    kh = (k @ wk).reshape(b, lk, N_HEADS, D_K).transpose(0, 2, 1, 3)
    vh = (v @ wv).reshape(b, lk, N_HEADS, D_V).transpose(0, 2, 1, 3)
    scores = jnp.einsum("bhqd,bhkd->bhqk", qh, kh) / math.sqrt(D_K)
    if mask is not None:
        scores = jnp.where(mask[:, None, :, :] == 0, -1e9, scores)
    attn = jax.nn.softmax(scores, axis=-1)
    ctx = jnp.einsum("bhqk,bhkd->bhqd", attn, vh)
    ctx = ctx.transpose(0, 2, 1, 3).reshape(b, lq, N_HEADS * D_V)
    return ctx @ wfc, attn


# ----------------------------- main -----------------------------------------------
if __name__ == "__main__":
    key = jax.random.PRNGKey(0)
    ks = jax.random.split(key, 8)

    def lin(k_, fan_in, fan_out):  # nn.Linear-style uniform init, stored as (in, out)
        bound = 1.0 / math.sqrt(fan_in)
        return jax.random.uniform(k_, (fan_in, fan_out), jnp.float32, -bound, bound)

    wq = lin(ks[0], D_MODEL, N_HEADS * D_K)
    wk = lin(ks[1], D_MODEL, N_HEADS * D_K)
    wv = lin(ks[2], D_MODEL, N_HEADS * D_V)
    wfc = lin(ks[3], N_HEADS * D_V, D_MODEL)

    q = jax.random.normal(ks[4], (B, L, D_MODEL), jnp.float32)
    k = jax.random.normal(ks[5], (B, L, D_MODEL), jnp.float32)
    v = jax.random.normal(ks[6], (B, L, D_MODEL), jnp.float32)

    # --- unmasked path (attn_mask=None, the module default) ---
    out, attn = jax.block_until_ready(
        multi_head_attention(q, k, v, wq, wk, wv, wfc,
                             n_heads=N_HEADS, d_k=D_K, d_v=D_V))
    ref_out, ref_attn = _ref_mha(q, k, v, wq, wk, wv, wfc)
    assert jnp.allclose(out, ref_out, atol=2e-3, rtol=2e-3)
    assert jnp.allclose(attn, ref_attn, atol=2e-3, rtol=2e-3)

    # --- masked path (0 in the mask means the position is masked out) ---
    mask = (jax.random.uniform(ks[7], (B, L, L)) > 0.3).astype(jnp.float32)
    mask = mask.at[:, :, 0].set(1.0)   # keep at least one visible key per query row
    out_m, attn_m = jax.block_until_ready(
        multi_head_attention(q, k, v, wq, wk, wv, wfc, attn_mask=mask,
                             n_heads=N_HEADS, d_k=D_K, d_v=D_V))
    ref_out_m, ref_attn_m = _ref_mha(q, k, v, wq, wk, wv, wfc, mask)
    assert jnp.allclose(out_m, ref_out_m, atol=2e-3, rtol=2e-3)
    assert jnp.allclose(attn_m, ref_attn_m, atol=2e-3, rtol=2e-3)

    # --- attn-gated path (output only; skips the attention-map store + write-back) ---
    out_ng, attn_ng = jax.block_until_ready(
        multi_head_attention(q, k, v, wq, wk, wv, wfc,
                             n_heads=N_HEADS, d_k=D_K, d_v=D_V,
                             return_attn_weights=False))
    assert attn_ng is None
    assert jnp.allclose(out_ng, ref_out, atol=2e-3, rtol=2e-3)

    print("KERNEL_OK")
</pallas_src>

<mosaic_0001>
module attributes {stable_mosaic.version = 11 : i64} {
  func.func @_mha_kernel(%arg0: memref<2x8x32xf32, #tpu.memory_space<vmem>>, %arg1: memref<2x8x32xf32, #tpu.memory_space<vmem>>, %arg2: memref<2x8x32xf32, #tpu.memory_space<vmem>>, %arg3: memref<32x96xf32, #tpu.memory_space<vmem>>, %arg4: memref<32x32xf32, #tpu.memory_space<vmem>>, %arg5: memref<2x8x32xf32, #tpu.memory_space<vmem>>, %arg6: memref<2x2x8x8xf32, #tpu.memory_space<vmem>>) attributes {dimension_semantics = [], scalar_prefetch = 0 : i64, scratch_operands = 0 : i64, tpu.core_type = #tpu.core_type<tc>} {
    %c0 = arith.constant 0 : index
    %c0_0 = arith.constant 0 : index
    %c0_1 = arith.constant 0 : index
    %0 = vector.load %arg0[%c0, %c0_0, %c0_1] : memref<2x8x32xf32, #tpu.memory_space<vmem>>, vector<2x8x32xf32>
    %1 = vector.shape_cast %0 : vector<2x8x32xf32> to vector<16x32xf32>
    %c0_2 = arith.constant 0 : index
    %c0_3 = arith.constant 0 : index
    %c0_4 = arith.constant 0 : index
    %2 = vector.load %arg1[%c0_2, %c0_3, %c0_4] : memref<2x8x32xf32, #tpu.memory_space<vmem>>, vector<2x8x32xf32>
    %3 = vector.shape_cast %2 : vector<2x8x32xf32> to vector<16x32xf32>
    %c0_5 = arith.constant 0 : index
    %c0_6 = arith.constant 0 : index
    %c0_7 = arith.constant 0 : index
    %4 = vector.load %arg2[%c0_5, %c0_6, %c0_7] : memref<2x8x32xf32, #tpu.memory_space<vmem>>, vector<2x8x32xf32>
    %5 = vector.shape_cast %4 : vector<2x8x32xf32> to vector<16x32xf32>
    %6 = tpu.concatenate %1, %3, %5 in 0 : vector<16x32xf32>, vector<16x32xf32>, vector<16x32xf32> -> vector<48x32xf32>
    %c0_8 = arith.constant 0 : index
    %c0_9 = arith.constant 0 : index
    %7 = vector.load %arg3[%c0_8, %c0_9] : memref<32x96xf32, #tpu.memory_space<vmem>>, vector<32x96xf32>
    %cst = arith.constant dense<0.000000e+00> : vector<48x96xf32>
    %8 = tpu.matmul %6, %7, %cst {dimension_numbers = #tpu.dot_dimension_numbers<[1], [0], [0], [1], [0, 0, 1, 1], [], []>} : vector<48x32xf32>, vector<32x96xf32>, vector<48x96xf32> -> vector<48x96xf32>
    %9 = vector.extract_strided_slice %8 {offsets = [0, 0], sizes = [16, 32], strides = [1, 1]} : vector<48x96xf32> to vector<16x32xf32>
    %10 = vector.shape_cast %9 : vector<16x32xf32> to vector<2x8x32xf32>
    %11 = vector.extract_strided_slice %8 {offsets = [16, 32], sizes = [16, 32], strides = [1, 1]} : vector<48x96xf32> to vector<16x32xf32>
    %12 = vector.shape_cast %11 : vector<16x32xf32> to vector<2x8x32xf32>
    %13 = vector.extract_strided_slice %8 {offsets = [32, 64], sizes = [16, 32], strides = [1, 1]} : vector<48x96xf32> to vector<16x32xf32>
    %14 = vector.shape_cast %13 : vector<16x32xf32> to vector<2x8x32xf32>
    %15 = vector.extract_strided_slice %10 {offsets = [0, 0, 0], sizes = [2, 8, 16], strides = [1, 1, 1]} : vector<2x8x32xf32> to vector<2x8x16xf32>
    %16 = vector.extract_strided_slice %12 {offsets = [0, 0, 0], sizes = [2, 8, 16], strides = [1, 1, 1]} : vector<2x8x32xf32> to vector<2x8x16xf32>
    %17 = vector.extract_strided_slice %14 {offsets = [0, 0, 0], sizes = [2, 8, 16], strides = [1, 1, 1]} : vector<2x8x32xf32> to vector<2x8x16xf32>
    "tpu.trace_start"() <{level = 10 : i32, message = "bqd,bkd->bqk"}> : () -> ()
    %cst_10 = arith.constant dense<0.000000e+00> : vector<2x8x8xf32>
    %18 = tpu.matmul %15, %16, %cst_10 {dimension_numbers = #tpu.dot_dimension_numbers<[2], [2], [1], [1], [0, 0, 0, 1, 1, 1], [0], [0]>} : vector<2x8x16xf32>, vector<2x8x16xf32>, vector<2x8x8xf32> -> vector<2x8x8xf32>
    "tpu.trace_stop"() : () -> ()
    %cst_11 = arith.constant dense<0xFF800000> : vector<2x8xf32>
    %19 = vector.multi_reduction <maximumf>, %18, %cst_11 [2] : vector<2x8x8xf32> to vector<2x8xf32>
    %20 = vector.shape_cast %19 : vector<2x8xf32> to vector<2x8x1xf32>
    %21 = vector.broadcast %20 : vector<2x8x1xf32> to vector<2x8x8xf32>
    %22 = arith.subf %18, %21 : vector<2x8x8xf32>
    %23 = math.exp %22 : vector<2x8x8xf32>
    %cst_12 = arith.constant dense<0.000000e+00> : vector<2x8xf32>
    %24 = vector.multi_reduction <add>, %23, %cst_12 [2] : vector<2x8x8xf32> to vector<2x8xf32>
    %25 = vector.shape_cast %24 : vector<2x8xf32> to vector<2x8x1xf32>
    %26 = tpu.reciprocal %25 {approx = true} : vector<2x8x1xf32> -> vector<2x8x1xf32>
    %27 = vector.broadcast %26 : vector<2x8x1xf32> to vector<2x8x8xf32>
    %28 = arith.mulf %23, %27 : vector<2x8x8xf32>
    %c0_13 = arith.constant 0 : index
    %c0_14 = arith.constant 0 : index
    %c0_15 = arith.constant 0 : index
    %c0_16 = arith.constant 0 : index
    %29 = vector.load %arg6[%c0_13, %c0_14, %c0_15, %c0_16] : memref<2x2x8x8xf32, #tpu.memory_space<vmem>>, vector<2x1x8x8xf32>
    %30 = vector.shape_cast %29 : vector<2x1x8x8xf32> to vector<2x8x8xf32>
    %31 = vector.shape_cast %28 : vector<2x8x8xf32> to vector<2x1x8x8xf32>
    tpu.vector_store %arg6[%c0_13, %c0_14, %c0_15, %c0_16], %31 {strides = array<i32>} : memref<2x2x8x8xf32, #tpu.memory_space<vmem>>, vector<2x1x8x8xf32>,
    "tpu.trace_start"() <{level = 10 : i32, message = "bqk,bkd->bqd"}> : () -> ()
    %cst_17 = arith.constant dense<0.000000e+00> : vector<2x8x16xf32>
    %32 = tpu.matmul %28, %17, %cst_17 {dimension_numbers = #tpu.dot_dimension_numbers<[2], [1], [1], [2], [0, 0, 0, 1, 1, 2], [0], [0]>} : vector<2x8x8xf32>, vector<2x8x16xf32>, vector<2x8x16xf32> -> vector<2x8x16xf32>
    "tpu.trace_stop"() : () -> ()
    %33 = vector.extract_strided_slice %10 {offsets = [0, 0, 16], sizes = [2, 8, 16], strides = [1, 1, 1]} : vector<2x8x32xf32> to vector<2x8x16xf32>
    %34 = vector.extract_strided_slice %12 {offsets = [0, 0, 16], sizes = [2, 8, 16], strides = [1, 1, 1]} : vector<2x8x32xf32> to vector<2x8x16xf32>
    %35 = vector.extract_strided_slice %14 {offsets = [0, 0, 16], sizes = [2, 8, 16], strides = [1, 1, 1]} : vector<2x8x32xf32> to vector<2x8x16xf32>
    "tpu.trace_start"() <{level = 10 : i32, message = "bqd,bkd->bqk"}> : () -> ()
    %cst_18 = arith.constant dense<0.000000e+00> : vector<2x8x8xf32>
    %36 = tpu.matmul %33, %34, %cst_18 {dimension_numbers = #tpu.dot_dimension_numbers<[2], [2], [1], [1], [0, 0, 0, 1, 1, 1], [0], [0]>} : vector<2x8x16xf32>, vector<2x8x16xf32>, vector<2x8x8xf32> -> vector<2x8x8xf32>
    "tpu.trace_stop"() : () -> ()
    %cst_19 = arith.constant dense<0xFF800000> : vector<2x8xf32>
    %37 = vector.multi_reduction <maximumf>, %36, %cst_19 [2] : vector<2x8x8xf32> to vector<2x8xf32>
    %38 = vector.shape_cast %37 : vector<2x8xf32> to vector<2x8x1xf32>
    %39 = vector.broadcast %38 : vector<2x8x1xf32> to vector<2x8x8xf32>
    %40 = arith.subf %36, %39 : vector<2x8x8xf32>
    %41 = math.exp %40 : vector<2x8x8xf32>
    %cst_20 = arith.constant dense<0.000000e+00> : vector<2x8xf32>
    %42 = vector.multi_reduction <add>, %41, %cst_20 [2] : vector<2x8x8xf32> to vector<2x8xf32>
    %43 = vector.shape_cast %42 : vector<2x8xf32> to vector<2x8x1xf32>
    %44 = tpu.reciprocal %43 {approx = true} : vector<2x8x1xf32> -> vector<2x8x1xf32>
    %45 = vector.broadcast %44 : vector<2x8x1xf32> to vector<2x8x8xf32>
    %46 = arith.mulf %41, %45 : vector<2x8x8xf32>
    %c0_21 = arith.constant 0 : index
    %c1 = arith.constant 1 : index
    %c0_22 = arith.constant 0 : index
    %c0_23 = arith.constant 0 : index
    %47 = vector.load %arg6[%c0_21, %c1, %c0_22, %c0_23] : memref<2x2x8x8xf32, #tpu.memory_space<vmem>>, vector<2x1x8x8xf32>
    %48 = vector.shape_cast %47 : vector<2x1x8x8xf32> to vector<2x8x8xf32>
    %49 = vector.shape_cast %46 : vector<2x8x8xf32> to vector<2x1x8x8xf32>
    tpu.vector_store %arg6[%c0_21, %c1, %c0_22, %c0_23], %49 {strides = array<i32>} : memref<2x2x8x8xf32, #tpu.memory_space<vmem>>, vector<2x1x8x8xf32>,
    "tpu.trace_start"() <{level = 10 : i32, message = "bqk,bkd->bqd"}> : () -> ()
    %cst_24 = arith.constant dense<0.000000e+00> : vector<2x8x16xf32>
    %50 = tpu.matmul %46, %35, %cst_24 {dimension_numbers = #tpu.dot_dimension_numbers<[2], [1], [1], [2], [0, 0, 0, 1, 1, 2], [0], [0]>} : vector<2x8x8xf32>, vector<2x8x16xf32>, vector<2x8x16xf32> -> vector<2x8x16xf32>
    "tpu.trace_stop"() : () -> ()
    %51 = tpu.concatenate %32, %50 in 2 : vector<2x8x16xf32>, vector<2x8x16xf32> -> vector<2x8x32xf32>
    %52 = vector.shape_cast %51 : vector<2x8x32xf32> to vector<16x32xf32>
    %c0_25 = arith.constant 0 : index
    %c0_26 = arith.constant 0 : index
    %53 = vector.load %arg4[%c0_25, %c0_26] : memref<32x32xf32, #tpu.memory_space<vmem>>, vector<32x32xf32>
    %cst_27 = arith.constant dense<0.000000e+00> : vector<16x32xf32>
    %54 = tpu.matmul %52, %53, %cst_27 {dimension_numbers = #tpu.dot_dimension_numbers<[1], [0], [0], [1], [0, 0, 1, 1], [], []>} : vector<16x32xf32>, vector<32x32xf32>, vector<16x32xf32> -> vector<16x32xf32>
    %55 = vector.shape_cast %54 : vector<16x32xf32> to vector<2x8x32xf32>
    %c0_28 = arith.constant 0 : index
    %c0_29 = arith.constant 0 : index
    %c0_30 = arith.constant 0 : index
    %56 = vector.load %arg5[%c0_28, %c0_29, %c0_30] : memref<2x8x32xf32, #tpu.memory_space<vmem>>, vector<2x8x32xf32>
    tpu.vector_store %arg5[%c0_28, %c0_29, %c0_30], %55 {strides = array<i32>} : memref<2x8x32xf32, #tpu.memory_space<vmem>>, vector<2x8x32xf32>,
    return
  }
}

</mosaic_0001>

<llo_original>
// kernel: tpu_custom_call.1
$region0: #{tpu_custom_call.1}
  #allocation0 [shape = 'u32[]', space=smem, size = 0x4, offset = 0x4, fixed_abs, tag = 'smem constant byte address 0x4 - core index']
  #allocation1 [shape = 'u32[144,128]{1,0:T(1,128)}', space=vmem, size = 0x12000, scoped, tag = 'internal scratch']
  %s0 = inlined_call_operand.hbm [shape: f32[2,8,32], index: 0, kind: input, shape index: {}]
  %s1 = inlined_call_operand.hbm [shape: f32[2,8,32], index: 1, kind: input, shape index: {}]
  %s2 = inlined_call_operand.hbm [shape: f32[2,8,32], index: 2, kind: input, shape index: {}]
  %s3 = inlined_call_operand.hbm [shape: f32[32,96], index: 3, kind: input, shape index: {}]
  %s4 = inlined_call_operand.hbm [shape: f32[32,32], index: 4, kind: input, shape index: {}]
  %s5 = inlined_call_operand.hbm [shape: f32[2,8,32], index: 5, kind: output, shape index: {0}]
  %s6 = inlined_call_operand.hbm [shape: f32[2,2,8,8], index: 6, kind: output, shape index: {1}]
  %7 = xla_tuple %s5, %s6
  %s8 = sld [smem:[#allocation0]]
  $region58: #{tpu_custom_call.1} parent=0
    _
  %s10 = ssub.s32 1, %s8
  %s11 = scalar_select 0, %s10, %s8
  $region1: #{tpu_custom_call.1} parent=0
    #allocation2 [shape = 'u8[8192]{0}', space=vmem, size = 0x2000, scoped, tag = 'input window, operand 0, single buffered']
    #allocation3 [shape = 's32[1]{0}', space=sflag, size = 0x4, scoped, tag = 'scoped memory for tpu_custom_call.1']
    #allocation4 [shape = 's32[1]{0}', space=sflag, size = 0x4, scoped, tag = 'scoped memory for tpu_custom_call.1']
    #allocation5 [shape = 'u8[8192]{0}', space=vmem, size = 0x2000, scoped, tag = 'input window, operand 1, single buffered']
    #allocation6 [shape = 's32[1]{0}', space=sflag, size = 0x4, scoped, tag = 'scoped memory for tpu_custom_call.1']
    #allocation7 [shape = 'u8[8192]{0}', space=vmem, size = 0x2000, scoped, tag = 'input window, operand 2, single buffered']
    #allocation8 [shape = 'u8[16384]{0}', space=vmem, size = 0x4000, scoped, tag = 'input window, operand 3, single buffered']
    #allocation9 [shape = 's32[1]{0}', space=sflag, size = 0x4, scoped, tag = 'scoped memory for tpu_custom_call.1']
    #allocation10 [shape = 'u8[16384]{0}', space=vmem, size = 0x4000, scoped, tag = 'input window, operand 4, single buffered']
    #allocation11 [shape = 'u8[8192]{0}', space=vmem, size = 0x2000, scoped, tag = 'output window, operand 0, single buffered']
    #allocation12 [shape = 'u8[16384]{0}', space=vmem, size = 0x4000, scoped, tag = 'output window, operand 1, single buffered']
    #allocation13 [shape = 's32[1]{0}', space=sflag, size = 0x4, scoped, tag = 'scoped memory for tpu_custom_call.1']
    %12 = vsyncpa [#allocation3], 0
    %13 = vsyncpa [#allocation6], 0
    %14 = vsyncpa [#allocation9], 0
    %15 = vsyncpa [#allocation4], 0
    %16 = vsyncpa [#allocation13], 0
    // Predicated region
    $region2: #{tpu_custom_call.1} parent=1 // pred_check
      _
    $region3: #{tpu_custom_call.1} parent=1 // pred_check_branch
      %18 = sbr.rel (0) target = $region5
    $region4: #{tpu_custom_call.1} parent=1 // pred_region
      %s20 = ssub.s32 256, 256
      %21 = vsyncadd [#allocation3], %s20
      %s22 = sshll.u32 [#allocation2], 4
      %s23 = int_to_ptr.vmem [resolvable:$true] %s22
      %28 = dma.hbm_to_vmem [thread:$0]  %s0, 256, %s23, [#allocation3], 128, 128, 8
    $region5: #{tpu_custom_call.1} parent=1 // pred_fallthru
      _
    // Predicated region
    $region6: #{tpu_custom_call.1} parent=1 // pred_check
      _
    $region7: #{tpu_custom_call.1} parent=1 // pred_check_branch
      %30 = sbr.rel (0) target = $region9
    $region8: #{tpu_custom_call.1} parent=1 // pred_region
      %s32 = ssub.s32 256, 256
      %33 = vsyncadd [#allocation6], %s32
      %s34 = sshll.u32 [#allocation5], 4
      %s35 = int_to_ptr.vmem [resolvable:$true] %s34
      %40 = dma.hbm_to_vmem [thread:$0]  %s1, 256, %s35, [#allocation6], 128, 128, 8
    $region9: #{tpu_custom_call.1} parent=1 // pred_fallthru
      _
    // Predicated region
    $region10: #{tpu_custom_call.1} parent=1 // pred_check
      _
    $region11: #{tpu_custom_call.1} parent=1 // pred_check_branch
      %42 = sbr.rel (0) target = $region13
    $region12: #{tpu_custom_call.1} parent=1 // pred_region
      %s44 = ssub.s32 256, 256
      %45 = vsyncadd [#allocation6], %s44
      %s46 = sshll.u32 [#allocation7], 4
      %s47 = int_to_ptr.vmem [resolvable:$true] %s46
      %52 = dma.hbm_to_vmem [thread:$0]  %s2, 256, %s47, [#allocation6], 128, 128, 8
    $region13: #{tpu_custom_call.1} parent=1 // pred_fallthru
      _
    // Predicated region
    $region14: #{tpu_custom_call.1} parent=1 // pred_check
      _
    $region15: #{tpu_custom_call.1} parent=1 // pred_check_branch
      %54 = sbr.rel (0) target = $region17
    $region16: #{tpu_custom_call.1} parent=1 // pred_region
      %s56 = ssub.s32 512, 512
      %57 = vsyncadd [#allocation9], %s56
      %s58 = sshll.u32 [#allocation8], 4
      %s59 = int_to_ptr.vmem [resolvable:$true] %s58
      %64 = dma.hbm_to_vmem [thread:$0]  %s3, 512, %s59, [#allocation9], 128, 128, 8
    $region17: #{tpu_custom_call.1} parent=1 // pred_fallthru
      _
    // Predicated region
    $region18: #{tpu_custom_call.1} parent=1 // pred_check
      _
    $region19: #{tpu_custom_call.1} parent=1 // pred_check_branch
      %66 = sbr.rel (0) target = $region21
    $region20: #{tpu_custom_call.1} parent=1 // pred_region
      %s68 = ssub.s32 512, 512
      %69 = vsyncadd [#allocation9], %s68
      %s70 = sshll.u32 [#allocation10], 4
      %s71 = int_to_ptr.vmem [resolvable:$true] %s70
      %76 = dma.hbm_to_vmem [thread:$0]  %s4, 512, %s71, [#allocation9], 128, 128, 8
    $region21: #{tpu_custom_call.1} parent=1 // pred_fallthru
      _
    // Predicated region
    $region22: #{tpu_custom_call.1} parent=1 // pred_check
      _
    $region23: #{tpu_custom_call.1} parent=1 // pred_check_branch
      %78 = sbr.rel (0) target = $region25
    $region24: #{tpu_custom_call.1} parent=1 // pred_region
      %79 = dma.done [#allocation3], 256
    $region25: #{tpu_custom_call.1} parent=1 // pred_fallthru
      _
    // Predicated region
    $region26: #{tpu_custom_call.1} parent=1 // pred_check
      _
    $region27: #{tpu_custom_call.1} parent=1 // pred_check_branch
      %81 = sbr.rel (0) target = $region29
    $region28: #{tpu_custom_call.1} parent=1 // pred_region
      %82 = dma.done [#allocation6], 256
    $region29: #{tpu_custom_call.1} parent=1 // pred_fallthru
      _
    // Predicated region
    $region30: #{tpu_custom_call.1} parent=1 // pred_check
      _
    $region31: #{tpu_custom_call.1} parent=1 // pred_check_branch
      %84 = sbr.rel (0) target = $region33
    $region32: #{tpu_custom_call.1} parent=1 // pred_region
      %85 = dma.done [#allocation6], 256
    $region33: #{tpu_custom_call.1} parent=1 // pred_fallthru
      _
    // Predicated region
    $region34: #{tpu_custom_call.1} parent=1 // pred_check
      _
    $region35: #{tpu_custom_call.1} parent=1 // pred_check_branch
      %87 = sbr.rel (0) target = $region37
    $region36: #{tpu_custom_call.1} parent=1 // pred_region
      %88 = dma.done [#allocation9], 512
    $region37: #{tpu_custom_call.1} parent=1 // pred_fallthru
      _
    // Predicated region
    $region38: #{tpu_custom_call.1} parent=1 // pred_check
      _
    $region39: #{tpu_custom_call.1} parent=1 // pred_check_branch
      %90 = sbr.rel (0) target = $region41
    $region40: #{tpu_custom_call.1} parent=1 // pred_region
      %91 = dma.done [#allocation9], 512
    $region41: #{tpu_custom_call.1} parent=1 // pred_fallthru
      _
    %v92 = vld [vmem:[#allocation2] sm:$0xff]
    %v93 = vld [vmem:[#allocation2 + $0x8] sm:$0xff]
    %v94 = vld [vmem:[#allocation5] sm:$0xff]
    %v95 = vld [vmem:[#allocation5 + $0x8] sm:$0xff]
    %v96 = vld [vmem:[#allocation7] sm:$0xff]
    %v97 = vld [vmem:[#allocation7 + $0x8] sm:$0xff]
    %v98 = vld [vmem:[#allocation8] sm:$0xff]
    %v99 = vld [vmem:[#allocation8 + $0x8] sm:$0xff]
    %v100 = vld [vmem:[#allocation8 + $0x10] sm:$0xff]
    %v101 = vld [vmem:[#allocation8 + $0x18] sm:$0xff]
    %vm102 = vcmask 261120
    %v104 = vsel %vm102, %v92, 0
    %v107 = vsel %vm102, %v93, 0
    %v110 = vsel %vm102, %v94, 0
    %v113 = vsel %vm102, %v95, 0
    %v116 = vsel %vm102, %v96, 0
    %v119 = vsel %vm102, %v97, 0
    %121 = vmatprep.subr.mxu0 0.0
    %122 = vmatpush1.msra.mxu0 %v98
    %123 = vmatprep.subr.mxu0 0.0
    %124 = vmatpush1.msra.mxu0 %v99
    %125 = vmatprep.subr.mxu0 0.0
    %126 = vmatpush1.msra.mxu0 %v100
    %127 = vmatprep.subr.mxu0 0.0
    %128 = vmatpush1.msra.mxu0 %v101
    %129 = vmatprep.subr.mxu0 0.0
    %130 = vmatpush1.msra.mxu0 0.0
    %131 = vmatprep.subr.mxu0 0.0
    %132 = vmatpush1.msra.mxu0 0.0
    %133 = vmatprep.subr.mxu0 0.0
    %134 = vmatpush1.msra.mxu0 0.0
    %135 = vmatprep.subr.mxu0 0.0
    %136 = vmatpush1.msra.mxu0 0.0
    %137 = vmatprep.subr.mxu0 0.0
    %138 = vmatpush1.msra.mxu0 0.0
    %139 = vmatprep.subr.mxu0 0.0
    %140 = vmatpush1.msra.mxu0 0.0
    %141 = vmatprep.subr.mxu0 0.0
    %142 = vmatpush1.msra.mxu0 0.0
    %143 = vmatprep.subr.mxu0 0.0
    %144 = vmatpush1.msra.mxu0 0.0
    %145 = vmatprep.subr.mxu0 0.0
    %146 = vmatpush1.msra.mxu0 0.0
    %147 = vmatprep.subr.mxu0 0.0
    %148 = vmatpush1.msra.mxu0 0.0
    %149 = vmatprep.subr.mxu0 0.0
    %150 = vmatpush1.msra.mxu0 0.0
    %151 = vmatprep.subr.mxu0 0.0
    %152 = vmatpush1.msra.mxu0 0.0
    %153 = vmatprep.subr.mxu0 0.0
    %154 = vmatpush1.msra.mxu0 0.0
    %155 = vmatprep.subr.mxu0 0.0
    %156 = vmatpush1.msra.mxu0 0.0
    %157 = vmatprep.subr.mxu0 0.0
    %158 = vmatpush1.msra.mxu0 0.0
    %159 = vmatprep.subr.mxu0 0.0
    %160 = vmatpush1.msra.mxu0 0.0
    %161 = vmatprep.subr.mxu0 0.0
    %162 = vmatpush1.msra.mxu0 0.0
    %163 = vmatprep.subr.mxu0 0.0
    %164 = vmatpush1.msra.mxu0 0.0
    %165 = vmatprep.subr.mxu0 0.0
    %166 = vmatpush1.msra.mxu0 0.0
    %167 = vmatprep.subr.mxu0 0.0
    %168 = vmatpush1.msra.mxu0 0.0
    %169 = vmatprep.subr.mxu0 0.0
    %170 = vmatpush1.msra.mxu0 0.0
    %171 = vmatprep.subr.mxu0 0.0
    %172 = vmatpush1.msra.mxu0 0.0
    %173 = vmatprep.subr.mxu0 0.0
    %174 = vmatpush1.msra.mxu0 0.0
    %175 = vmatprep.subr.mxu0 0.0
    %176 = vmatpush1.msra.mxu0 0.0
    %177 = vmatprep.subr.mxu0 0.0
    %178 = vmatpush1.msra.mxu0 0.0
    %179 = vmatprep.subr.mxu0 0.0
    %180 = vmatpush1.msra.mxu0 0.0
    %181 = vmatprep.subr.mxu0 0.0
    %182 = vmatpush1.msra.mxu0 0.0
    %183 = vmatprep.subr.mxu0 0.0
    %184 = vmatpush1.msra.mxu0 0.0
    %185 = vmatprep.mubr.f32.mxu0 0.0
    %186 = vmatmul.mubr.f32.gmra.mrb[0].mxu0 %v104
    %v187 = vpop.f32.mrb[0].mxu0
    %v188 = vadd.f32 0.0, %v187
    %v189 = vpop.f32.mrb[0].mxu0
    %190 = vmatprep.mubr.f32.mxu0 0.0
    %191 = vmatmul.mubr.f32.gmra.mrb[0].mxu0 %v107
    %v192 = vpop.f32.mrb[0].mxu0
    %v193 = vadd.f32 0.0, %v192
    %v194 = vpop.f32.mrb[0].mxu0
    %195 = vmatprep.mubr.f32.mxu0 0.0
    %196 = vmatmul.mubr.f32.gmra.mrb[0].mxu0 %v110
    %v197 = vpop.f32.mrb[0].mxu0
    %v198 = vadd.f32 0.0, %v197
    %v199 = vpop.f32.mrb[0].mxu0
    %200 = vmatprep.mubr.f32.mxu0 0.0
    %201 = vmatmul.mubr.f32.gmra.mrb[0].mxu0 %v113
    %v202 = vpop.f32.mrb[0].mxu0
    %v203 = vadd.f32 0.0, %v202
    %v204 = vpop.f32.mrb[0].mxu0
    %205 = vmatprep.mubr.f32.mxu0 0.0
    %206 = vmatmul.mubr.f32.gmra.mrb[0].mxu0 %v116
    %v207 = vpop.f32.mrb[0].mxu0
    %v208 = vadd.f32 0.0, %v207
    %v209 = vpop.f32.mrb[0].mxu0
    %210 = vmatprep.mubr.f32.mxu0 0.0
    %211 = vmatmul.mubr.f32.gmra.mrb[0].mxu0 %v119
    %v212 = vpop.f32.mrb[0].mxu0
    %v213 = vadd.f32 0.0, %v212
    %v214 = vpop.f32.mrb[0].mxu0
    %215 = vdwg.mxu0
    %217 = vrot.lane.b32.xlu0 %v198, 96
    %v218 = vpop.permute.xlu0 %217
    %vm219 = vcmask 130048
    %v221 = vsel %vm219, %v188, 0
    %v223 = vsel %vm219, %v218, 0
    %225 = vmatprep.subr.mxu0 0.0
    %226 = vmatpush1.xpose.msra.mxu0 %v223
    %227 = vmatprep.subr.mxu0 0.0
    %228 = vmatpush1.xpose.msra.mxu0 0.0
    %229 = vmatprep.subr.mxu0 0.0
    %230 = vmatpush1.xpose.msra.mxu0 0.0
    %231 = vmatprep.subr.mxu0 0.0
    %232 = vmatpush1.xpose.msra.mxu0 0.0
    %233 = vmatprep.subr.mxu0 0.0
    %234 = vmatpush1.xpose.msra.mxu0 0.0
    %235 = vmatprep.subr.mxu0 0.0
    %236 = vmatpush1.xpose.msra.mxu0 0.0
    %237 = vmatprep.subr.mxu0 0.0
    %238 = vmatpush1.xpose.msra.mxu0 0.0
    %239 = vmatprep.subr.mxu0 0.0
    %240 = vmatpush1.xpose.msra.mxu0 0.0
    %241 = vmatprep.subr.mxu0 0.0
    %242 = vmatpush1.xpose.msra.mxu0 0.0
    %243 = vmatprep.subr.mxu0 0.0
    %244 = vmatpush1.xpose.msra.mxu0 0.0
    %245 = vmatprep.subr.mxu0 0.0
    %246 = vmatpush1.xpose.msra.mxu0 0.0
    %247 = vmatprep.subr.mxu0 0.0
    %248 = vmatpush1.xpose.msra.mxu0 0.0
    %249 = vmatprep.subr.mxu0 0.0
    %250 = vmatpush1.xpose.msra.mxu0 0.0
    %251 = vmatprep.subr.mxu0 0.0
    %252 = vmatpush1.xpose.msra.mxu0 0.0
    %253 = vmatprep.subr.mxu0 0.0
    %254 = vmatpush1.xpose.msra.mxu0 0.0
    %255 = vmatprep.subr.mxu0 0.0
    %256 = vmatpush1.xpose.msra.mxu0 0.0
    %257 = vmatprep.subr.mxu0 0.0
    %258 = vmatpush1.xpose.msra.mxu0 0.0
    %259 = vmatprep.subr.mxu0 0.0
    %260 = vmatpush1.xpose.msra.mxu0 0.0
    %261 = vmatprep.subr.mxu0 0.0
    %262 = vmatpush1.xpose.msra.mxu0 0.0
    %263 = vmatprep.subr.mxu0 0.0
    %264 = vmatpush1.xpose.msra.mxu0 0.0
    %265 = vmatprep.subr.mxu0 0.0
    %266 = vmatpush1.xpose.msra.mxu0 0.0
    %267 = vmatprep.subr.mxu0 0.0
    %268 = vmatpush1.xpose.msra.mxu0 0.0
    %269 = vmatprep.subr.mxu0 0.0
    %270 = vmatpush1.xpose.msra.mxu0 0.0
    %271 = vmatprep.subr.mxu0 0.0
    %272 = vmatpush1.xpose.msra.mxu0 0.0
    %273 = vmatprep.subr.mxu0 0.0
    %274 = vmatpush1.xpose.msra.mxu0 0.0
    %275 = vmatprep.subr.mxu0 0.0
    %276 = vmatpush1.xpose.msra.mxu0 0.0
    %277 = vmatprep.subr.mxu0 0.0
    %278 = vmatpush1.xpose.msra.mxu0 0.0
    %279 = vmatprep.subr.mxu0 0.0
    %280 = vmatpush1.xpose.msra.mxu0 0.0
    %281 = vmatprep.subr.mxu0 0.0
    %282 = vmatpush1.xpose.msra.mxu0 0.0
    %283 = vmatprep.subr.mxu0 0.0
    %284 = vmatpush1.xpose.msra.mxu0 0.0
    %285 = vmatprep.subr.mxu0 0.0
    %286 = vmatpush1.xpose.msra.mxu0 0.0
    %287 = vmatprep.subr.mxu0 0.0
    %288 = vmatpush1.xpose.msra.mxu0 0.0
    %289 = vmatprep.mubr.f32.mxu0 0.0
    %290 = vmatmul.mubr.f32.gmra.mrb[0].mxu0 %v221
    %v291 = vpop.f32.mrb[0].mxu0
    %v292 = vadd.f32 0.0, %v291
    %v293 = vpop.f32.mrb[0].mxu0
    %294 = vdwg.mxu0
    %296 = vrot.lane.b32.xlu0 %v203, 96
    %v297 = vpop.permute.xlu0 %296
    %v299 = vsel %vm219, %v193, 0
    %v301 = vsel %vm219, %v297, 0
    %303 = vmatprep.subr.mxu0 0.0
    %304 = vmatpush1.xpose.msra.mxu0 %v301
    %305 = vmatprep.subr.mxu0 0.0
    %306 = vmatpush1.xpose.msra.mxu0 0.0
    %307 = vmatprep.subr.mxu0 0.0
    %308 = vmatpush1.xpose.msra.mxu0 0.0
    %309 = vmatprep.subr.mxu0 0.0
    %310 = vmatpush1.xpose.msra.mxu0 0.0
    %311 = vmatprep.subr.mxu0 0.0
    %312 = vmatpush1.xpose.msra.mxu0 0.0
    %313 = vmatprep.subr.mxu0 0.0
    %314 = vmatpush1.xpose.msra.mxu0 0.0
    %315 = vmatprep.subr.mxu0 0.0
    %316 = vmatpush1.xpose.msra.mxu0 0.0
    %317 = vmatprep.subr.mxu0 0.0
    %318 = vmatpush1.xpose.msra.mxu0 0.0
    %319 = vmatprep.subr.mxu0 0.0
    %320 = vmatpush1.xpose.msra.mxu0 0.0
    %321 = vmatprep.subr.mxu0 0.0
    %322 = vmatpush1.xpose.msra.mxu0 0.0
    %323 = vmatprep.subr.mxu0 0.0
    %324 = vmatpush1.xpose.msra.mxu0 0.0
    %325 = vmatprep.subr.mxu0 0.0
    %326 = vmatpush1.xpose.msra.mxu0 0.0
    %327 = vmatprep.subr.mxu0 0.0
    %328 = vmatpush1.xpose.msra.mxu0 0.0
    %329 = vmatprep.subr.mxu0 0.0
    %330 = vmatpush1.xpose.msra.mxu0 0.0
    %331 = vmatprep.subr.mxu0 0.0
    %332 = vmatpush1.xpose.msra.mxu0 0.0
    %333 = vmatprep.subr.mxu0 0.0
    %334 = vmatpush1.xpose.msra.mxu0 0.0
    %335 = vmatprep.subr.mxu0 0.0
    %336 = vmatpush1.xpose.msra.mxu0 0.0
    %337 = vmatprep.subr.mxu0 0.0
    %338 = vmatpush1.xpose.msra.mxu0 0.0
    %339 = vmatprep.subr.mxu0 0.0
    %340 = vmatpush1.xpose.msra.mxu0 0.0
    %341 = vmatprep.subr.mxu0 0.0
    %342 = vmatpush1.xpose.msra.mxu0 0.0
    %343 = vmatprep.subr.mxu0 0.0
    %344 = vmatpush1.xpose.msra.mxu0 0.0
    %345 = vmatprep.subr.mxu0 0.0
    %346 = vmatpush1.xpose.msra.mxu0 0.0
    %347 = vmatprep.subr.mxu0 0.0
    %348 = vmatpush1.xpose.msra.mxu0 0.0
    %349 = vmatprep.subr.mxu0 0.0
    %350 = vmatpush1.xpose.msra.mxu0 0.0
    %351 = vmatprep.subr.mxu0 0.0
    %352 = vmatpush1.xpose.msra.mxu0 0.0
    %353 = vmatprep.subr.mxu0 0.0
    %354 = vmatpush1.xpose.msra.mxu0 0.0
    %355 = vmatprep.subr.mxu0 0.0
    %356 = vmatpush1.xpose.msra.mxu0 0.0
    %357 = vmatprep.subr.mxu0 0.0
    %358 = vmatpush1.xpose.msra.mxu0 0.0
    %359 = vmatprep.subr.mxu0 0.0
    %360 = vmatpush1.xpose.msra.mxu0 0.0
    %361 = vmatprep.subr.mxu0 0.0
    %362 = vmatpush1.xpose.msra.mxu0 0.0
    %363 = vmatprep.subr.mxu0 0.0
    %364 = vmatpush1.xpose.msra.mxu0 0.0
    %365 = vmatprep.subr.mxu0 0.0
    %366 = vmatpush1.xpose.msra.mxu0 0.0
    %367 = vmatprep.mubr.f32.mxu0 0.0
    %368 = vmatmul.mubr.f32.gmra.mrb[0].mxu0 %v299
    %v369 = vpop.f32.mrb[0].mxu0
    %v370 = vadd.f32 0.0, %v369
    %v371 = vpop.f32.mrb[0].mxu0
    %372 = vdwg.mxu0
    %vm373 = vcmask 64512
    %v374 = vsel %vm373, %v292, -inf
    %375 = vmax.xlane.f32.xlu0 %v374
    %v376 = vpop.xlane.xlu0 %375
    %v377 = vsel %vm373, %v370, -inf
    %378 = vmax.xlane.f32.xlu0 %v377
    %v379 = vpop.xlane.xlu0 %378
    %v380 = vsub.f32 %v292, %v376
    %v381 = vsub.f32 %v370, %v379
    %v382 = vmul.f32 %v380, 1.442695
    %v383 = vpow.pop %v382
    %v384 = vmul.f32 %v381, 1.442695
    %v385 = vpow.pop %v384
    %v386 = vsel %vm373, %v383, 0.0
    %387 = vadd.xlane.f32.xlu0 %v386
    %v388 = vpop.xlane.xlu0 %387
    %v389 = vsel %vm373, %v385, 0.0
    %390 = vadd.xlane.f32.xlu0 %v389
    %v391 = vpop.xlane.xlu0 %390
    %v392 = vrcp.pop %v388
    %v393 = vrcp.pop %v391
    %v394 = vmul.f32 %v383, %v392
    %v395 = vmul.f32 %v385, %v393
    %396 = vst.msk [vmem:[#allocation12] sm:$0xff] %vm373, %v394
    %397 = vst.msk [vmem:[#allocation12 + $0x10] sm:$0xff] %vm373, %v395
    %399 = vrot.lane.b32.xlu0 %v208, 64
    %v400 = vpop.permute.xlu0 %399
    %v403 = vsel %vm373, %v394, 0
    %405 = vmatprep.subr.mxu0 0.0
    %406 = vmatpush1.msra.mxu0 %v400
    %407 = vmatprep.subr.mxu0 0.0
    %408 = vmatpush1.msra.mxu0 0.0
    %409 = vmatprep.subr.mxu0 0.0
    %410 = vmatpush1.msra.mxu0 0.0
    %411 = vmatprep.subr.mxu0 0.0
    %412 = vmatpush1.msra.mxu0 0.0
    %413 = vmatprep.subr.mxu0 0.0
    %414 = vmatpush1.msra.mxu0 0.0
    %415 = vmatprep.subr.mxu0 0.0
    %416 = vmatpush1.msra.mxu0 0.0
    %417 = vmatprep.subr.mxu0 0.0
    %418 = vmatpush1.msra.mxu0 0.0
    %419 = vmatprep.subr.mxu0 0.0
    %420 = vmatpush1.msra.mxu0 0.0
    %421 = vmatprep.subr.mxu0 0.0
    %422 = vmatpush1.msra.mxu0 0.0
    %423 = vmatprep.subr.mxu0 0.0
    %424 = vmatpush1.msra.mxu0 0.0
    %425 = vmatprep.subr.mxu0 0.0
    %426 = vmatpush1.msra.mxu0 0.0
    %427 = vmatprep.subr.mxu0 0.0
    %428 = vmatpush1.msra.mxu0 0.0
    %429 = vmatprep.subr.mxu0 0.0
    %430 = vmatpush1.msra.mxu0 0.0
    %431 = vmatprep.subr.mxu0 0.0
    %432 = vmatpush1.msra.mxu0 0.0
    %433 = vmatprep.subr.mxu0 0.0
    %434 = vmatpush1.msra.mxu0 0.0
    %435 = vmatprep.subr.mxu0 0.0
    %436 = vmatpush1.msra.mxu0 0.0
    %437 = vmatprep.subr.mxu0 0.0
    %438 = vmatpush1.msra.mxu0 0.0
    %439 = vmatprep.subr.mxu0 0.0
    %440 = vmatpush1.msra.mxu0 0.0
    %441 = vmatprep.subr.mxu0 0.0
    %442 = vmatpush1.msra.mxu0 0.0
    %443 = vmatprep.subr.mxu0 0.0
    %444 = vmatpush1.msra.mxu0 0.0
    %445 = vmatprep.subr.mxu0 0.0
    %446 = vmatpush1.msra.mxu0 0.0
    %447 = vmatprep.subr.mxu0 0.0
    %448 = vmatpush1.msra.mxu0 0.0
    %449 = vmatprep.subr.mxu0 0.0
    %450 = vmatpush1.msra.mxu0 0.0
    %451 = vmatprep.subr.mxu0 0.0
    %452 = vmatpush1.msra.mxu0 0.0
    %453 = vmatprep.subr.mxu0 0.0
    %454 = vmatpush1.msra.mxu0 0.0
    %455 = vmatprep.subr.mxu0 0.0
    %456 = vmatpush1.msra.mxu0 0.0
    %457 = vmatprep.subr.mxu0 0.0
    %458 = vmatpush1.msra.mxu0 0.0
    %459 = vmatprep.subr.mxu0 0.0
    %460 = vmatpush1.msra.mxu0 0.0
    %461 = vmatprep.subr.mxu0 0.0
    %462 = vmatpush1.msra.mxu0 0.0
    %463 = vmatprep.subr.mxu0 0.0
    %464 = vmatpush1.msra.mxu0 0.0
    %465 = vmatprep.subr.mxu0 0.0
    %466 = vmatpush1.msra.mxu0 0.0
    %467 = vmatprep.subr.mxu0 0.0
    %468 = vmatpush1.msra.mxu0 0.0
    %469 = vmatprep.mubr.f32.mxu0 0.0
    %470 = vmatmul.mubr.f32.gmra.mrb[0].mxu0 %v403
    %v471 = vpop.f32.mrb[0].mxu0
    %v472 = vadd.f32 0.0, %v471
    %v473 = vpop.f32.mrb[0].mxu0
    %474 = vdwg.mxu0
    %476 = vrot.lane.b32.xlu0 %v213, 64
    %v477 = vpop.permute.xlu0 %476
    %v480 = vsel %vm373, %v395, 0
    %482 = vmatprep.subr.mxu0 0.0
    %483 = vmatpush1.msra.mxu0 %v477
    %484 = vmatprep.subr.mxu0 0.0
    %485 = vmatpush1.msra.mxu0 0.0
    %486 = vmatprep.subr.mxu0 0.0
    %487 = vmatpush1.msra.mxu0 0.0
    %488 = vmatprep.subr.mxu0 0.0
    %489 = vmatpush1.msra.mxu0 0.0
    %490 = vmatprep.subr.mxu0 0.0
    %491 = vmatpush1.msra.mxu0 0.0
    %492 = vmatprep.subr.mxu0 0.0
    %493 = vmatpush1.msra.mxu0 0.0
    %494 = vmatprep.subr.mxu0 0.0
    %495 = vmatpush1.msra.mxu0 0.0
    %496 = vmatprep.subr.mxu0 0.0
    %497 = vmatpush1.msra.mxu0 0.0
    %498 = vmatprep.subr.mxu0 0.0
    %499 = vmatpush1.msra.mxu0 0.0
    %500 = vmatprep.subr.mxu0 0.0
    %501 = vmatpush1.msra.mxu0 0.0
    %502 = vmatprep.subr.mxu0 0.0
    %503 = vmatpush1.msra.mxu0 0.0
    %504 = vmatprep.subr.mxu0 0.0
    %505 = vmatpush1.msra.mxu0 0.0
    %506 = vmatprep.subr.mxu0 0.0
    %507 = vmatpush1.msra.mxu0 0.0
    %508 = vmatprep.subr.mxu0 0.0
    %509 = vmatpush1.msra.mxu0 0.0
    %510 = vmatprep.subr.mxu0 0.0
    %511 = vmatpush1.msra.mxu0 0.0
    %512 = vmatprep.subr.mxu0 0.0
    %513 = vmatpush1.msra.mxu0 0.0
    %514 = vmatprep.subr.mxu0 0.0
    %515 = vmatpush1.msra.mxu0 0.0
    %516 = vmatprep.subr.mxu0 0.0
    %517 = vmatpush1.msra.mxu0 0.0
    %518 = vmatprep.subr.mxu0 0.0
    %519 = vmatpush1.msra.mxu0 0.0
    %520 = vmatprep.subr.mxu0 0.0
    %521 = vmatpush1.msra.mxu0 0.0
    %522 = vmatprep.subr.mxu0 0.0
    %523 = vmatpush1.msra.mxu0 0.0
    %524 = vmatprep.subr.mxu0 0.0
    %525 = vmatpush1.msra.mxu0 0.0
    %526 = vmatprep.subr.mxu0 0.0
    %527 = vmatpush1.msra.mxu0 0.0
    %528 = vmatprep.subr.mxu0 0.0
    %529 = vmatpush1.msra.mxu0 0.0
    %530 = vmatprep.subr.mxu0 0.0
    %531 = vmatpush1.msra.mxu0 0.0
    %532 = vmatprep.subr.mxu0 0.0
    %533 = vmatpush1.msra.mxu0 0.0
    %534 = vmatprep.subr.mxu0 0.0
    %535 = vmatpush1.msra.mxu0 0.0
    %536 = vmatprep.subr.mxu0 0.0
    %537 = vmatpush1.msra.mxu0 0.0
    %538 = vmatprep.subr.mxu0 0.0
    %539 = vmatpush1.msra.mxu0 0.0
    %540 = vmatprep.subr.mxu0 0.0
    %541 = vmatpush1.msra.mxu0 0.0
    %542 = vmatprep.subr.mxu0 0.0
    %543 = vmatpush1.msra.mxu0 0.0
    %544 = vmatprep.subr.mxu0 0.0
    %545 = vmatpush1.msra.mxu0 0.0
    %546 = vmatprep.mubr.f32.mxu0 0.0
    %547 = vmatmul.mubr.f32.gmra.mrb[0].mxu0 %v480
    %v548 = vpop.f32.mrb[0].mxu0
    %v549 = vadd.f32 0.0, %v548
    %v550 = vpop.f32.mrb[0].mxu0
    %551 = vdwg.mxu0
    %552 = vrot.lane.b32.xlu0 %v188, 112
    %v553 = vpop.permute.xlu0 %552
    %554 = vrot.lane.b32.xlu0 %v198, 80
    %v555 = vpop.permute.xlu0 %554
    %v556 = vsel %vm219, %v553, 0
    %v558 = vsel %vm219, %v555, 0
    %560 = vmatprep.subr.mxu0 0.0
    %561 = vmatpush1.xpose.msra.mxu0 %v558
    %562 = vmatprep.subr.mxu0 0.0
    %563 = vmatpush1.xpose.msra.mxu0 0.0
    %564 = vmatprep.subr.mxu0 0.0
    %565 = vmatpush1.xpose.msra.mxu0 0.0
    %566 = vmatprep.subr.mxu0 0.0
    %567 = vmatpush1.xpose.msra.mxu0 0.0
    %568 = vmatprep.subr.mxu0 0.0
    %569 = vmatpush1.xpose.msra.mxu0 0.0
    %570 = vmatprep.subr.mxu0 0.0
    %571 = vmatpush1.xpose.msra.mxu0 0.0
    %572 = vmatprep.subr.mxu0 0.0
    %573 = vmatpush1.xpose.msra.mxu0 0.0
    %574 = vmatprep.subr.mxu0 0.0
    %575 = vmatpush1.xpose.msra.mxu0 0.0
    %576 = vmatprep.subr.mxu0 0.0
    %577 = vmatpush1.xpose.msra.mxu0 0.0
    %578 = vmatprep.subr.mxu0 0.0
    %579 = vmatpush1.xpose.msra.mxu0 0.0
    %580 = vmatprep.subr.mxu0 0.0
    %581 = vmatpush1.xpose.msra.mxu0 0.0
    %582 = vmatprep.subr.mxu0 0.0
    %583 = vmatpush1.xpose.msra.mxu0 0.0
    %584 = vmatprep.subr.mxu0 0.0
    %585 = vmatpush1.xpose.msra.mxu0 0.0
    %586 = vmatprep.subr.mxu0 0.0
    %587 = vmatpush1.xpose.msra.mxu0 0.0
    %588 = vmatprep.subr.mxu0 0.0
    %589 = vmatpush1.xpose.msra.mxu0 0.0
    %590 = vmatprep.subr.mxu0 0.0
    %591 = vmatpush1.xpose.msra.mxu0 0.0
    %592 = vmatprep.subr.mxu0 0.0
    %593 = vmatpush1.xpose.msra.mxu0 0.0
    %594 = vmatprep.subr.mxu0 0.0
    %595 = vmatpush1.xpose.msra.mxu0 0.0
    %596 = vmatprep.subr.mxu0 0.0
    %597 = vmatpush1.xpose.msra.mxu0 0.0
    %598 = vmatprep.subr.mxu0 0.0
    %599 = vmatpush1.xpose.msra.mxu0 0.0
    %600 = vmatprep.subr.mxu0 0.0
    %601 = vmatpush1.xpose.msra.mxu0 0.0
    %602 = vmatprep.subr.mxu0 0.0
    %603 = vmatpush1.xpose.msra.mxu0 0.0
    %604 = vmatprep.subr.mxu0 0.0
    %605 = vmatpush1.xpose.msra.mxu0 0.0
    %606 = vmatprep.subr.mxu0 0.0
    %607 = vmatpush1.xpose.msra.mxu0 0.0
    %608 = vmatprep.subr.mxu0 0.0
    %609 = vmatpush1.xpose.msra.mxu0 0.0
    %610 = vmatprep.subr.mxu0 0.0
    %611 = vmatpush1.xpose.msra.mxu0 0.0
    %612 = vmatprep.subr.mxu0 0.0
    %613 = vmatpush1.xpose.msra.mxu0 0.0
    %614 = vmatprep.subr.mxu0 0.0
    %615 = vmatpush1.xpose.msra.mxu0 0.0
    %616 = vmatprep.subr.mxu0 0.0
    %617 = vmatpush1.xpose.msra.mxu0 0.0
    %618 = vmatprep.subr.mxu0 0.0
    %619 = vmatpush1.xpose.msra.mxu0 0.0
    %620 = vmatprep.subr.mxu0 0.0
    %621 = vmatpush1.xpose.msra.mxu0 0.0
    %622 = vmatprep.subr.mxu0 0.0
    %623 = vmatpush1.xpose.msra.mxu0 0.0
    %624 = vmatprep.mubr.f32.mxu0 0.0
    %625 = vmatmul.mubr.f32.gmra.mrb[0].mxu0 %v556
    %v626 = vpop.f32.mrb[0].mxu0
    %v627 = vadd.f32 0.0, %v626
    %v628 = vpop.f32.mrb[0].mxu0
    %629 = vdwg.mxu0
    %630 = vrot.lane.b32.xlu0 %v193, 112
    %v631 = vpop.permute.xlu0 %630
    %632 = vrot.lane.b32.xlu0 %v203, 80
    %v633 = vpop.permute.xlu0 %632
    %v634 = vsel %vm219, %v631, 0
    %v636 = vsel %vm219, %v633, 0
    %638 = vmatprep.subr.mxu0 0.0
    %639 = vmatpush1.xpose.msra.mxu0 %v636
    %640 = vmatprep.subr.mxu0 0.0
    %641 = vmatpush1.xpose.msra.mxu0 0.0
    %642 = vmatprep.subr.mxu0 0.0
    %643 = vmatpush1.xpose.msra.mxu0 0.0
    %644 = vmatprep.subr.mxu0 0.0
    %645 = vmatpush1.xpose.msra.mxu0 0.0
    %646 = vmatprep.subr.mxu0 0.0
    %647 = vmatpush1.xpose.msra.mxu0 0.0
    %648 = vmatprep.subr.mxu0 0.0
    %649 = vmatpush1.xpose.msra.mxu0 0.0
    %650 = vmatprep.subr.mxu0 0.0
    %651 = vmatpush1.xpose.msra.mxu0 0.0
    %652 = vmatprep.subr.mxu0 0.0
    %653 = vmatpush1.xpose.msra.mxu0 0.0
    %654 = vmatprep.subr.mxu0 0.0
    %655 = vmatpush1.xpose.msra.mxu0 0.0
    %656 = vmatprep.subr.mxu0 0.0
    %657 = vmatpush1.xpose.msra.mxu0 0.0
    %658 = vmatprep.subr.mxu0 0.0
    %659 = vmatpush1.xpose.msra.mxu0 0.0
    %660 = vmatprep.subr.mxu0 0.0
    %661 = vmatpush1.xpose.msra.mxu0 0.0
    %662 = vmatprep.subr.mxu0 0.0
    %663 = vmatpush1.xpose.msra.mxu0 0.0
    %664 = vmatprep.subr.mxu0 0.0
    %665 = vmatpush1.xpose.msra.mxu0 0.0
    %666 = vmatprep.subr.mxu0 0.0
    %667 = vmatpush1.xpose.msra.mxu0 0.0
    %668 = vmatprep.subr.mxu0 0.0
    %669 = vmatpush1.xpose.msra.mxu0 0.0
    %670 = vmatprep.subr.mxu0 0.0
    %671 = vmatpush1.xpose.msra.mxu0 0.0
    %672 = vmatprep.subr.mxu0 0.0
    %673 = vmatpush1.xpose.msra.mxu0 0.0
    %674 = vmatprep.subr.mxu0 0.0
    %675 = vmatpush1.xpose.msra.mxu0 0.0
    %676 = vmatprep.subr.mxu0 0.0
    %677 = vmatpush1.xpose.msra.mxu0 0.0
    %678 = vmatprep.subr.mxu0 0.0
    %679 = vmatpush1.xpose.msra.mxu0 0.0
    %680 = vmatprep.subr.mxu0 0.0
    %681 = vmatpush1.xpose.msra.mxu0 0.0
    %682 = vmatprep.subr.mxu0 0.0
    %683 = vmatpush1.xpose.msra.mxu0 0.0
    %684 = vmatprep.subr.mxu0 0.0
    %685 = vmatpush1.xpose.msra.mxu0 0.0
    %686 = vmatprep.subr.mxu0 0.0
    %687 = vmatpush1.xpose.msra.mxu0 0.0
    %688 = vmatprep.subr.mxu0 0.0
    %689 = vmatpush1.xpose.msra.mxu0 0.0
    %690 = vmatprep.subr.mxu0 0.0
    %691 = vmatpush1.xpose.msra.mxu0 0.0
    %692 = vmatprep.subr.mxu0 0.0
    %693 = vmatpush1.xpose.msra.mxu0 0.0
    %694 = vmatprep.subr.mxu0 0.0
    %695 = vmatpush1.xpose.msra.mxu0 0.0
    %696 = vmatprep.subr.mxu0 0.0
    %697 = vmatpush1.xpose.msra.mxu0 0.0
    %698 = vmatprep.subr.mxu0 0.0
    %699 = vmatpush1.xpose.msra.mxu0 0.0
    %700 = vmatprep.subr.mxu0 0.0
    %701 = vmatpush1.xpose.msra.mxu0 0.0
    %702 = vmatprep.mubr.f32.mxu0 0.0
    %703 = vmatmul.mubr.f32.gmra.mrb[0].mxu0 %v634
    %v704 = vpop.f32.mrb[0].mxu0
    %v705 = vadd.f32 0.0, %v704
    %v706 = vpop.f32.mrb[0].mxu0
    %707 = vdwg.mxu0
    %v708 = vsel %vm373, %v627, -inf
    %709 = vmax.xlane.f32.xlu0 %v708
    %v710 = vpop.xlane.xlu0 %709
    %v711 = vsel %vm373, %v705, -inf
    %712 = vmax.xlane.f32.xlu0 %v711
    %v713 = vpop.xlane.xlu0 %712
    %v714 = vsub.f32 %v627, %v710
    %v715 = vsub.f32 %v705, %v713
    %v716 = vmul.f32 %v714, 1.442695
    %v717 = vpow.pop %v716
    %v718 = vmul.f32 %v715, 1.442695
    %v719 = vpow.pop %v718
    %v720 = vsel %vm373, %v717, 0.0
    %721 = vadd.xlane.f32.xlu0 %v720
    %v722 = vpop.xlane.xlu0 %721
    %v723 = vsel %vm373, %v719, 0.0
    %724 = vadd.xlane.f32.xlu0 %v723
    %v725 = vpop.xlane.xlu0 %724
    %v726 = vrcp.pop %v722
    %v727 = vrcp.pop %v725
    %v728 = vmul.f32 %v717, %v726
    %v729 = vmul.f32 %v719, %v727
    %s730 = scalar_lea.vmem [#allocation12], 8
    %731 = vst.msk [vmem:[%s730] sm:$0xff] %vm373, %v728
    %732 = vst.msk [vmem:[%s730 + $0x10] sm:$0xff] %vm373, %v729
    %733 = vrot.lane.b32.xlu0 %v208, 48
    %v734 = vpop.permute.xlu0 %733
    %v737 = vsel %vm373, %v728, 0
    %739 = vmatprep.subr.mxu0 0.0
    %740 = vmatpush1.msra.mxu0 %v734
    %741 = vmatprep.subr.mxu0 0.0
    %742 = vmatpush1.msra.mxu0 0.0
    %743 = vmatprep.subr.mxu0 0.0
    %744 = vmatpush1.msra.mxu0 0.0
    %745 = vmatprep.subr.mxu0 0.0
    %746 = vmatpush1.msra.mxu0 0.0
    %747 = vmatprep.subr.mxu0 0.0
    %748 = vmatpush1.msra.mxu0 0.0
    %749 = vmatprep.subr.mxu0 0.0
    %750 = vmatpush1.msra.mxu0 0.0
    %751 = vmatprep.subr.mxu0 0.0
    %752 = vmatpush1.msra.mxu0 0.0
    %753 = vmatprep.subr.mxu0 0.0
    %754 = vmatpush1.msra.mxu0 0.0
    %755 = vmatprep.subr.mxu0 0.0
    %756 = vmatpush1.msra.mxu0 0.0
    %757 = vmatprep.subr.mxu0 0.0
    %758 = vmatpush1.msra.mxu0 0.0
    %759 = vmatprep.subr.mxu0 0.0
    %760 = vmatpush1.msra.mxu0 0.0
    %761 = vmatprep.subr.mxu0 0.0
    %762 = vmatpush1.msra.mxu0 0.0
    %763 = vmatprep.subr.mxu0 0.0
    %764 = vmatpush1.msra.mxu0 0.0
    %765 = vmatprep.subr.mxu0 0.0
    %766 = vmatpush1.msra.mxu0 0.0
    %767 = vmatprep.subr.mxu0 0.0
    %768 = vmatpush1.msra.mxu0 0.0
    %769 = vmatprep.subr.mxu0 0.0
    %770 = vmatpush1.msra.mxu0 0.0
    %771 = vmatprep.subr.mxu0 0.0
    %772 = vmatpush1.msra.mxu0 0.0
    %773 = vmatprep.subr.mxu0 0.0
    %774 = vmatpush1.msra.mxu0 0.0
    %775 = vmatprep.subr.mxu0 0.0
    %776 = vmatpush1.msra.mxu0 0.0
    %777 = vmatprep.subr.mxu0 0.0
    %778 = vmatpush1.msra.mxu0 0.0
    %779 = vmatprep.subr.mxu0 0.0
    %780 = vmatpush1.msra.mxu0 0.0
    %781 = vmatprep.subr.mxu0 0.0
    %782 = vmatpush1.msra.mxu0 0.0
    %783 = vmatprep.subr.mxu0 0.0
    %784 = vmatpush1.msra.mxu0 0.0
    %785 = vmatprep.subr.mxu0 0.0
    %786 = vmatpush1.msra.mxu0 0.0
    %787 = vmatprep.subr.mxu0 0.0
    %788 = vmatpush1.msra.mxu0 0.0
    %789 = vmatprep.subr.mxu0 0.0
    %790 = vmatpush1.msra.mxu0 0.0
    %791 = vmatprep.subr.mxu0 0.0
    %792 = vmatpush1.msra.mxu0 0.0
    %793 = vmatprep.subr.mxu0 0.0
    %794 = vmatpush1.msra.mxu0 0.0
    %795 = vmatprep.subr.mxu0 0.0
    %796 = vmatpush1.msra.mxu0 0.0
    %797 = vmatprep.subr.mxu0 0.0
    %798 = vmatpush1.msra.mxu0 0.0
    %799 = vmatprep.subr.mxu0 0.0
    %800 = vmatpush1.msra.mxu0 0.0
    %801 = vmatprep.subr.mxu0 0.0
    %802 = vmatpush1.msra.mxu0 0.0
    %803 = vmatprep.mubr.f32.mxu0 0.0
    %804 = vmatmul.mubr.f32.gmra.mrb[0].mxu0 %v737
    %v805 = vpop.f32.mrb[0].mxu0
    %v806 = vadd.f32 0.0, %v805
    %v807 = vpop.f32.mrb[0].mxu0
    %808 = vdwg.mxu0
    %809 = vrot.lane.b32.xlu0 %v213, 48
    %v810 = vpop.permute.xlu0 %809
    %v813 = vsel %vm373, %v729, 0
    %815 = vmatprep.subr.mxu0 0.0
    %816 = vmatpush1.msra.mxu0 %v810
    %817 = vmatprep.subr.mxu0 0.0
    %818 = vmatpush1.msra.mxu0 0.0
    %819 = vmatprep.subr.mxu0 0.0
    %820 = vmatpush1.msra.mxu0 0.0
    %821 = vmatprep.subr.mxu0 0.0
    %822 = vmatpush1.msra.mxu0 0.0
    %823 = vmatprep.subr.mxu0 0.0
    %824 = vmatpush1.msra.mxu0 0.0
    %825 = vmatprep.subr.mxu0 0.0
    %826 = vmatpush1.msra.mxu0 0.0
    %827 = vmatprep.subr.mxu0 0.0
    %828 = vmatpush1.msra.mxu0 0.0
    %829 = vmatprep.subr.mxu0 0.0
    %830 = vmatpush1.msra.mxu0 0.0
    %831 = vmatprep.subr.mxu0 0.0
    %832 = vmatpush1.msra.mxu0 0.0
    %833 = vmatprep.subr.mxu0 0.0
    %834 = vmatpush1.msra.mxu0 0.0
    %835 = vmatprep.subr.mxu0 0.0
    %836 = vmatpush1.msra.mxu0 0.0
    %837 = vmatprep.subr.mxu0 0.0
    %838 = vmatpush1.msra.mxu0 0.0
    %839 = vmatprep.subr.mxu0 0.0
    %840 = vmatpush1.msra.mxu0 0.0
    %841 = vmatprep.subr.mxu0 0.0
    %842 = vmatpush1.msra.mxu0 0.0
    %843 = vmatprep.subr.mxu0 0.0
    %844 = vmatpush1.msra.mxu0 0.0
    %845 = vmatprep.subr.mxu0 0.0
    %846 = vmatpush1.msra.mxu0 0.0
    %847 = vmatprep.subr.mxu0 0.0
    %848 = vmatpush1.msra.mxu0 0.0
    %849 = vmatprep.subr.mxu0 0.0
    %850 = vmatpush1.msra.mxu0 0.0
    %851 = vmatprep.subr.mxu0 0.0
    %852 = vmatpush1.msra.mxu0 0.0
    %853 = vmatprep.subr.mxu0 0.0
    %854 = vmatpush1.msra.mxu0 0.0
    %855 = vmatprep.subr.mxu0 0.0
    %856 = vmatpush1.msra.mxu0 0.0
    %857 = vmatprep.subr.mxu0 0.0
    %858 = vmatpush1.msra.mxu0 0.0
    %859 = vmatprep.subr.mxu0 0.0
    %860 = vmatpush1.msra.mxu0 0.0
    %861 = vmatprep.subr.mxu0 0.0
    %862 = vmatpush1.msra.mxu0 0.0
    %863 = vmatprep.subr.mxu0 0.0
    %864 = vmatpush1.msra.mxu0 0.0
    %865 = vmatprep.subr.mxu0 0.0
    %866 = vmatpush1.msra.mxu0 0.0
    %867 = vmatprep.subr.mxu0 0.0
    %868 = vmatpush1.msra.mxu0 0.0
    %869 = vmatprep.subr.mxu0 0.0
    %870 = vmatpush1.msra.mxu0 0.0
    %871 = vmatprep.subr.mxu0 0.0
    %872 = vmatpush1.msra.mxu0 0.0
    %873 = vmatprep.subr.mxu0 0.0
    %874 = vmatpush1.msra.mxu0 0.0
    %875 = vmatprep.subr.mxu0 0.0
    %876 = vmatpush1.msra.mxu0 0.0
    %877 = vmatprep.subr.mxu0 0.0
    %878 = vmatpush1.msra.mxu0 0.0
    %879 = vmatprep.mubr.f32.mxu0 0.0
    %880 = vmatmul.mubr.f32.gmra.mrb[0].mxu0 %v813
    %v881 = vpop.f32.mrb[0].mxu0
    %v882 = vadd.f32 0.0, %v881
    %v883 = vpop.f32.mrb[0].mxu0
    %884 = vdwg.mxu0
    %887 = vrot.lane.b32.xlu0 %v806, 16
    %v888 = vpop.permute.xlu0 %887
    %889 = vrot.lane.b32.xlu0 %v882, 16
    %v890 = vpop.permute.xlu0 %889
    %v893 = vsel %vm219, %v472, %v888
    %v894 = vsel %vm219, %v549, %v890
    %v895 = vld [vmem:[#allocation10] sm:$0xff]
    %v896 = vld [vmem:[#allocation10 + $0x8] sm:$0xff]
    %v897 = vld [vmem:[#allocation10 + $0x10] sm:$0xff]
    %v898 = vld [vmem:[#allocation10 + $0x18] sm:$0xff]
    %v900 = vsel %vm102, %v893, 0
    %v903 = vsel %vm102, %v894, 0
    %905 = vmatprep.subr.mxu0 0.0
    %906 = vmatpush1.msra.mxu0 %v895
    %907 = vmatprep.subr.mxu0 0.0
    %908 = vmatpush1.msra.mxu0 %v896
    %909 = vmatprep.subr.mxu0 0.0
    %910 = vmatpush1.msra.mxu0 %v897
    %911 = vmatprep.subr.mxu0 0.0
    %912 = vmatpush1.msra.mxu0 %v898
    %913 = vmatprep.subr.mxu0 0.0
    %914 = vmatpush1.msra.mxu0 0.0
    %915 = vmatprep.subr.mxu0 0.0
    %916 = vmatpush1.msra.mxu0 0.0
    %917 = vmatprep.subr.mxu0 0.0
    %918 = vmatpush1.msra.mxu0 0.0
    %919 = vmatprep.subr.mxu0 0.0
    %920 = vmatpush1.msra.mxu0 0.0
    %921 = vmatprep.subr.mxu0 0.0
    %922 = vmatpush1.msra.mxu0 0.0
    %923 = vmatprep.subr.mxu0 0.0
    %924 = vmatpush1.msra.mxu0 0.0
    %925 = vmatprep.subr.mxu0 0.0
    %926 = vmatpush1.msra.mxu0 0.0
    %927 = vmatprep.subr.mxu0 0.0
    %928 = vmatpush1.msra.mxu0 0.0
    %929 = vmatprep.subr.mxu0 0.0
    %930 = vmatpush1.msra.mxu0 0.0
    %931 = vmatprep.subr.mxu0 0.0
    %932 = vmatpush1.msra.mxu0 0.0
    %933 = vmatprep.subr.mxu0 0.0
    %934 = vmatpush1.msra.mxu0 0.0
    %935 = vmatprep.subr.mxu0 0.0
    %936 = vmatpush1.msra.mxu0 0.0
    %937 = vmatprep.subr.mxu0 0.0
    %938 = vmatpush1.msra.mxu0 0.0
    %939 = vmatprep.subr.mxu0 0.0
    %940 = vmatpush1.msra.mxu0 0.0
    %941 = vmatprep.subr.mxu0 0.0
    %942 = vmatpush1.msra.mxu0 0.0
    %943 = vmatprep.subr.mxu0 0.0
    %944 = vmatpush1.msra.mxu0 0.0
    %945 = vmatprep.subr.mxu0 0.0
    %946 = vmatpush1.msra.mxu0 0.0
    %947 = vmatprep.subr.mxu0 0.0
    %948 = vmatpush1.msra.mxu0 0.0
    %949 = vmatprep.subr.mxu0 0.0
    %950 = vmatpush1.msra.mxu0 0.0
    %951 = vmatprep.subr.mxu0 0.0
    %952 = vmatpush1.msra.mxu0 0.0
    %953 = vmatprep.subr.mxu0 0.0
    %954 = vmatpush1.msra.mxu0 0.0
    %955 = vmatprep.subr.mxu0 0.0
    %956 = vmatpush1.msra.mxu0 0.0
    %957 = vmatprep.subr.mxu0 0.0
    %958 = vmatpush1.msra.mxu0 0.0
    %959 = vmatprep.subr.mxu0 0.0
    %960 = vmatpush1.msra.mxu0 0.0
    %961 = vmatprep.subr.mxu0 0.0
    %962 = vmatpush1.msra.mxu0 0.0
    %963 = vmatprep.subr.mxu0 0.0
    %964 = vmatpush1.msra.mxu0 0.0
    %965 = vmatprep.subr.mxu0 0.0
    %966 = vmatpush1.msra.mxu0 0.0
    %967 = vmatprep.subr.mxu0 0.0
    %968 = vmatpush1.msra.mxu0 0.0
    %969 = vmatprep.mubr.f32.mxu0 0.0
    %970 = vmatmul.mubr.f32.gmra.mrb[0].mxu0 %v900
    %v971 = vpop.f32.mrb[0].mxu0
    %v972 = vadd.f32 0.0, %v971
    %v973 = vpop.f32.mrb[0].mxu0
    %974 = vmatprep.mubr.f32.mxu0 0.0
    %975 = vmatmul.mubr.f32.gmra.mrb[0].mxu0 %v903
    %v976 = vpop.f32.mrb[0].mxu0
    %v977 = vadd.f32 0.0, %v976
    %v978 = vpop.f32.mrb[0].mxu0
    %979 = vdwg.mxu0
    %980 = vst.msk [vmem:[#allocation11] sm:$0xff] %vm102, %v972
    %981 = vst.msk [vmem:[#allocation11 + $0x8] sm:$0xff] %vm102, %v977
    // Predicated region
    $region42: #{tpu_custom_call.1} parent=1 // pred_check
      _
    $region43: #{tpu_custom_call.1} parent=1 // pred_check_branch
      %983 = sbr.rel (0) target = $region45
    $region44: #{tpu_custom_call.1} parent=1 // pred_region
      %s985 = ssub.s32 256, 256
      %986 = vsyncadd [#allocation4], %s985
      %s987 = sshll.u32 [#allocation11], 4
      %s988 = int_to_ptr.vmem [resolvable:$true] %s987
      %993 = dma.vmem_to_hbm [thread:$0]  %s988, 256, %s5, [#allocation4], 128, 128, 8
    $region45: #{tpu_custom_call.1} parent=1 // pred_fallthru
      _
    // Predicated region
    $region46: #{tpu_custom_call.1} parent=1 // pred_check
      _
    $region47: #{tpu_custom_call.1} parent=1 // pred_check_branch
      %995 = sbr.rel (0) target = $region49
    $region48: #{tpu_custom_call.1} parent=1 // pred_region
      %s997 = ssub.s32 512, 512
      %998 = vsyncadd [#allocation13], %s997
      %s999 = sshll.u32 [#allocation12], 4
      %s1000 = int_to_ptr.vmem [resolvable:$true] %s999
      %1005 = dma.vmem_to_hbm [thread:$0]  %s1000, 512, %s6, [#allocation13], 128, 128, 8
    $region49: #{tpu_custom_call.1} parent=1 // pred_fallthru
      _
    // Predicated region
    $region50: #{tpu_custom_call.1} parent=1 // pred_check
      _
    $region51: #{tpu_custom_call.1} parent=1 // pred_check_branch
      %1007 = sbr.rel (0) target = $region53
    $region52: #{tpu_custom_call.1} parent=1 // pred_region
      %1008 = dma.done [#allocation4], 256
    $region53: #{tpu_custom_call.1} parent=1 // pred_fallthru
      _
    // Predicated region
    $region54: #{tpu_custom_call.1} parent=1 // pred_check
      _
    $region55: #{tpu_custom_call.1} parent=1 // pred_check_branch
      %1010 = sbr.rel (0) target = $region57
    $region56: #{tpu_custom_call.1} parent=1 // pred_region
      %1011 = dma.done [#allocation13], 512
    $region57: #{tpu_custom_call.1} parent=1 // pred_fallthru
      _
    %1012 = vsyncpa [#allocation3], 1
    %1013 = vsyncpa [#allocation6], 1
    %1014 = vsyncpa [#allocation9], 1
    %1015 = vsyncpa [#allocation4], 1
    %1016 = vsyncpa [#allocation13], 1

</llo_original>
